<compile_context>
chip_gen: v7x
topology: tpu7x:2x2x1
jax: 0.10.0
libtpu: 0.0.40
codegen_flags: <defaults>
</compile_context>

<pallas_src>
import jax
import jax.numpy as jnp
import numpy as np
from jax.experimental import pallas as pl
from jax.experimental.pallas import tpu as pltpu

_EPS_PD = 1e-6    # F.pairwise_distance default eps (added to the difference)
_EPS_COS = 1e-8   # F.cosine_similarity default eps (norm clamp)


# ----------------------------------------------------------------------------
# Tiling helpers
# ----------------------------------------------------------------------------
def _round_up(x, m):
    return (x + m - 1) // m * m


def _vmem_limit_bytes():
    """Generation-aware scoped-VMEM limit (75% of physical, capped at 112 MiB)."""
    phys = 64 << 20                      # conservative fallback (v7x per-core VMEM)
    try:
        phys = int(pltpu.get_tpu_info().vmem_capacity_bytes)
    except Exception:
        pass
    return max(32 << 20, min(phys * 3 // 4, 112 << 20))


def _choose_tiles(B, L, D, itemsize, block_budget_bytes):
    """Pick (TB, TL): batch-block rows and L-chunk length for the score kernel."""
    def in_bytes(tb, tl):
        # 4 embedding streams, double-buffered by the Pallas pipeline.
        return 4 * 2 * tb * tl * D * itemsize

    if in_bytes(1, L) <= block_budget_bytes:
        tb = block_budget_bytes // in_bytes(1, L)
        if tb >= B:
            return B, L                          # whole batch fits in one block
        tb = max(8, (tb // 8) * 8)               # output 2nd-minor dim: mult of 8
        return int(tb), L
    # A single full-L batch row does not fit: chunk L.  TL must divide L (so the
    # trailing chunk never sums out-of-bounds rows into the accumulators) and be
    # a multiple of 8 (sublane layout).
    tl = None
    for cand in range(8, L, 8):
        if L % cand == 0 and in_bytes(8, cand) <= block_budget_bytes:
            tl = cand
    if tl is None:
        tl = 8 if L % 8 == 0 else L
    return 8, int(tl)


# ----------------------------------------------------------------------------
# Pallas kernel: fused fwd/rev strand scores, batch-blocked, L-chunk accumulated
# ----------------------------------------------------------------------------
def vep_scores_pallas(embed_ref_fwd, embed_alt_fwd, embed_ref_rev, embed_alt_rev):
    """Fused (get_scores(fwd) + get_scores(rev)) / 2 on [B, L, D] embeddings."""
    B, L, D = embed_ref_fwd.shape
    itemsize = jnp.dtype(embed_ref_fwd.dtype).itemsize

    vmem_limit = _vmem_limit_bytes()
    block_budget = int(vmem_limit * 0.6)         # headroom for outputs/scratch
    TB, TL = _choose_tiles(B, L, D, itemsize, block_budget)

    Bp = _round_up(B, TB)
    if Bp != B:                                  # pad batch to a multiple of TB
        pad = ((0, Bp - B), (0, 0), (0, 0))
        embed_ref_fwd, embed_alt_fwd, embed_ref_rev, embed_alt_rev = (
            jnp.pad(x, pad) for x in
            (embed_ref_fwd, embed_alt_fwd, embed_ref_rev, embed_alt_rev))

    Dp = _round_up(D, 128)
    W = 128 + 3 * Dp          # lane-dense slab: [scalars(128) | eds | ips | cds]
    n_l_d = float(L * D)      # full L*D (for the pairwise_distance eps term)

    def kernel(erf_ref, eaf_ref, err_ref, ear_ref, out_ref, acc_ref):
        k = pl.program_id(1)

        @pl.when(k == 0)
        def _init():
            acc_ref[...] = jnp.zeros_like(acc_ref)

        def accumulate(base, r_ref, a_ref):
            # (TB, TL, D) bf16 blocks -> f32 accumulation of per-D partial sums.
            r = r_ref[...].astype(jnp.float32)
            a = a_ref[...].astype(jnp.float32)
            diff = r - a
            acc_ref[base + 0] += jnp.sum(r * r, axis=1)        # Σ_l ref²
            acc_ref[base + 1] += jnp.sum(a * a, axis=1)        # Σ_l alt²
            acc_ref[base + 2] += jnp.sum(r * a, axis=1)        # Σ_l ref·alt
            acc_ref[base + 3] += jnp.sum(diff * diff, axis=1)  # Σ_l diff²
            acc_ref[base + 4] += jnp.sum(diff, axis=1)         # Σ_l diff (eps term)

        accumulate(0, erf_ref, eaf_ref)   # fwd strand
        accumulate(5, err_ref, ear_ref)   # rev strand

        @pl.when(k == pl.num_programs(1) - 1)
        def _finalize():
            def strand(base):
                s_rr = acc_ref[base + 0]
                s_aa = acc_ref[base + 1]
                s_ra = acc_ref[base + 2]
                s_dd = acc_ref[base + 3]
                s_d = acc_ref[base + 4]
                # per-hidden-dim scores
                eds = jnp.sqrt(s_dd)                                   # (TB, D)
                ips = s_ra
                cds = 1.0 - s_ra / (jnp.maximum(jnp.sqrt(s_rr), _EPS_COS) *
                                    jnp.maximum(jnp.sqrt(s_aa), _EPS_COS))
                # full (flattened) scores derived from the per-D partials
                ip_full = jnp.sum(s_ra, axis=1, keepdims=True)         # (TB, 1)
                nr = jnp.sqrt(jnp.sum(s_rr, axis=1, keepdims=True))
                na = jnp.sqrt(jnp.sum(s_aa, axis=1, keepdims=True))
                cd_full = 1.0 - ip_full / (jnp.maximum(nr, _EPS_COS) *
                                           jnp.maximum(na, _EPS_COS))
                # F.pairwise_distance adds eps to the difference before squaring:
                # Σ(d+eps)² = Σd² + 2·eps·Σd + N·eps²
                ed_full = jnp.sqrt(jnp.sum(s_dd, axis=1, keepdims=True) +
                                   2.0 * _EPS_PD * jnp.sum(s_d, axis=1, keepdims=True) +
                                   n_l_d * (_EPS_PD * _EPS_PD))
                return ed_full, ip_full, cd_full, eds, ips, cds

            fwd = strand(0)
            rev = strand(5)
            ed, ip, cd, eds, ips, cds = [0.5 * (f + r) for f, r in zip(fwd, rev)]

            if D < Dp:                                  # clear pad lanes (static)
                out_ref[...] = jnp.zeros_like(out_ref)
            # scalars packed into the first 128-lane region (lanes 0,1,2)
            lane = jax.lax.broadcasted_iota(jnp.int32, (out_ref.shape[0], 128), 1)
            scal = jnp.where(lane == 0, ed, 0.0)
            scal = jnp.where(lane == 1, ip, scal)
            scal = jnp.where(lane == 2, cd, scal)
            out_ref[:, 0:128] = scal
            # per-D vectors at 128-aligned region offsets
            out_ref[:, 128:128 + D] = eds
            out_ref[:, 128 + Dp:128 + Dp + D] = ips
            out_ref[:, 128 + 2 * Dp:128 + 2 * Dp + D] = cds

    in_spec = pl.BlockSpec((TB, TL, D), lambda i, k: (i, k, 0))
    out_spec = pl.BlockSpec((TB, W), lambda i, k: (i, 0))

    slab = pl.pallas_call(
        kernel,
        out_shape=jax.ShapeDtypeStruct((Bp, W), jnp.float32),
        grid_spec=pltpu.PrefetchScalarGridSpec(
            num_scalar_prefetch=0,
            grid=(Bp // TB, L // TL),
            in_specs=[in_spec, in_spec, in_spec, in_spec],
            out_specs=out_spec,
            scratch_shapes=[pltpu.VMEM((10, TB, D), jnp.float32)],
        ),
        compiler_params=pltpu.CompilerParams(
            dimension_semantics=("parallel", "arbitrary"),
            vmem_limit_bytes=vmem_limit),
    )(embed_ref_fwd, embed_alt_fwd, embed_ref_rev, embed_alt_rev)

    # Reassemble torch.cat((euclid, inner, cos, euclids, inners, coss), dim=1).
    # This touches only a (B, 3+3D) array — negligible next to the kernel I/O.
    slab = slab[:B]
    ed = slab[:, 0:1]
    ip = slab[:, 1:2]
    cd = slab[:, 2:3]
    eds = slab[:, 128:128 + D]
    ips = slab[:, 128 + Dp:128 + Dp + D]
    cds = slab[:, 128 + 2 * Dp:128 + 2 * Dp + D]
    return jnp.concatenate([ed, ip, cd, eds, ips, cds], axis=1)


# ----------------------------------------------------------------------------
# Synthetic "AutoModel" stand-in (stays in XLA)
# ----------------------------------------------------------------------------
def init_params(key, vocab_size, aux_dim, hidden):
    k1, k2, k3 = jax.random.split(key, 3)
    return dict(
        tok_emb=0.1 * jax.random.normal(k1, (vocab_size, hidden), jnp.float32),
        w_aux=0.1 * jax.random.normal(k2, (aux_dim, hidden), jnp.float32),
        b_aux=0.1 * jax.random.normal(k3, (hidden,), jnp.float32),
    )


def get_embedding(params, input_ids, aux_features):
    # TODO(synk): original module calls a pretrained HF AutoModel (.last_hidden_state);
    # replaced by a deterministic synthetic embedding net of the same I/O signature.
    # The real (frozen transformer) backbone cannot be fused into the score kernel,
    # so it remains an XLA stage; only its bf16 output is streamed by the kernel.
    tok = params["tok_emb"][input_ids]                              # [B, L, D]
    proj = aux_features @ params["w_aux"] + params["b_aux"]         # [B, L, D]
    return jnp.tanh(tok + proj)


def vep_embeddings_forward(params,
                           input_ids_ref_fwd, aux_features_ref_fwd,
                           input_ids_alt_fwd, aux_features_alt_fwd,
                           input_ids_ref_rev, aux_features_ref_rev,
                           input_ids_alt_rev, aux_features_alt_rev,
                           storage_dtype=jnp.bfloat16):
    # bf16 storage halves the HBM bytes the (memory-bound) score kernel reads;
    # all reductions inside the kernel are carried out in f32.
    erf = get_embedding(params, input_ids_ref_fwd, aux_features_ref_fwd).astype(storage_dtype)
    eaf = get_embedding(params, input_ids_alt_fwd, aux_features_alt_fwd).astype(storage_dtype)
    err = get_embedding(params, input_ids_ref_rev, aux_features_ref_rev).astype(storage_dtype)
    ear = get_embedding(params, input_ids_alt_rev, aux_features_alt_rev).astype(storage_dtype)
    return vep_scores_pallas(erf, eaf, err, ear)


# ----------------------------------------------------------------------------
# Pure-JAX reference (mirrors the PyTorch functions) for correctness checking
# ----------------------------------------------------------------------------
def _ref_get_scores(er, ea):
    B = er.shape[0]
    rf = er.reshape(B, -1)
    af = ea.reshape(B, -1)
    euclid = jnp.sqrt(jnp.sum((rf - af + _EPS_PD) ** 2, axis=1))
    inner = jnp.sum(er * ea, axis=(1, 2))
    nr = jnp.sqrt(jnp.sum(rf * rf, axis=1))
    na = jnp.sqrt(jnp.sum(af * af, axis=1))
    cosd = 1.0 - jnp.sum(rf * af, axis=1) / (
        jnp.maximum(nr, _EPS_COS) * jnp.maximum(na, _EPS_COS))
    euclids = jnp.linalg.norm(er - ea, axis=1)
    inners = jnp.sum(er * ea, axis=1)
    nrd = jnp.sqrt(jnp.sum(er * er, axis=1))
    nad = jnp.sqrt(jnp.sum(ea * ea, axis=1))
    cosds = 1.0 - inners / (jnp.maximum(nrd, _EPS_COS) * jnp.maximum(nad, _EPS_COS))
    return jnp.concatenate(
        [euclid[:, None], inner[:, None], cosd[:, None], euclids, inners, cosds],
        axis=1)


def _ref_forward(params, irf, arf, iaf, aaf, irr, arr, iar, aar,
                 storage_dtype=jnp.bfloat16):
    def emb(i, a):  # same bf16 storage rounding as the kernel path, math in f32
        return get_embedding(params, i, a).astype(storage_dtype).astype(jnp.float32)
    fwd = _ref_get_scores(emb(irf, arf), emb(iaf, aaf))
    rev = _ref_get_scores(emb(irr, arr), emb(iar, aar))
    return 0.5 * (fwd + rev)


# ----------------------------------------------------------------------------
if __name__ == "__main__":
    B, L, D, A, V = 2, 8, 32, 4, 16   # batch, seq, hidden, aux-features, vocab

    key = jax.random.PRNGKey(0)
    keys = jax.random.split(key, 9)
    params = init_params(keys[0], V, A, D)

    ids_ref_fwd = jax.random.randint(keys[1], (B, L), 0, V)
    aux_ref_fwd = jax.random.normal(keys[2], (B, L, A), jnp.float32)
    ids_alt_fwd = jax.random.randint(keys[3], (B, L), 0, V)
    aux_alt_fwd = jax.random.normal(keys[4], (B, L, A), jnp.float32)
    ids_ref_rev = jax.random.randint(keys[5], (B, L), 0, V)
    aux_ref_rev = jax.random.normal(keys[6], (B, L, A), jnp.float32)
    ids_alt_rev = jax.random.randint(keys[7], (B, L), 0, V)
    aux_alt_rev = jax.random.normal(keys[8], (B, L, A), jnp.float32)

    args = (ids_ref_fwd, aux_ref_fwd, ids_alt_fwd, aux_alt_fwd,
            ids_ref_rev, aux_ref_rev, ids_alt_rev, aux_alt_rev)

    out = jax.jit(lambda *a: vep_embeddings_forward(params, *a))(*args)
    out = jax.block_until_ready(out)

    ref = _ref_forward(params, *args)
    assert out.shape == (B, 3 + 3 * D), out.shape
    np.testing.assert_allclose(np.asarray(out), np.asarray(ref),
                               rtol=5e-5, atol=5e-5)
    print("KERNEL_OK")
</pallas_src>

<mosaic_0001>
module attributes {stable_mosaic.version = 11 : i64} {
  func.func @kernel(%arg0: i32, %arg1: i32, %arg2: memref<2x8x32xbf16, #tpu.memory_space<vmem>>, %arg3: memref<2x8x32xbf16, #tpu.memory_space<vmem>>, %arg4: memref<2x8x32xbf16, #tpu.memory_space<vmem>>, %arg5: memref<2x8x32xbf16, #tpu.memory_space<vmem>>, %arg6: memref<2x512xf32, #tpu.memory_space<vmem>>, %arg7: memref<10x2x32xf32, #tpu.memory_space<vmem>>) attributes {dimension_semantics = [#tpu.dimension_semantics<parallel>, #tpu.dimension_semantics<arbitrary>], iteration_bounds = array<i64: 1, 1>, scalar_prefetch = 0 : i64, scratch_operands = 1 : i64, tpu.core_type = #tpu.core_type<tc>, window_params = [{transform_indices = @transform_0, window_bounds = array<i64: 2, 8, 32>}, {transform_indices = @transform_1, window_bounds = array<i64: 2, 8, 32>}, {transform_indices = @transform_2, window_bounds = array<i64: 2, 8, 32>}, {transform_indices = @transform_3, window_bounds = array<i64: 2, 8, 32>}, {transform_indices = @transform_4, window_bounds = array<i64: 2, 512>}]} {
    %c0_i32 = arith.constant 0 : i32
    %0 = arith.cmpi eq, %arg1, %c0_i32 : i32
    %1 = arith.extui %0 : i1 to i32
    %c0_i32_0 = arith.constant 0 : i32
    %2 = arith.cmpi ne, %1, %c0_i32_0 : i32
    scf.if %2 {
      %cst_74 = arith.constant 0.000000e+00 : f32
      %94 = vector.broadcast %cst_74 : f32 to vector<10x2x32xf32>
      %c0_75 = arith.constant 0 : index
      %c0_76 = arith.constant 0 : index
      %c0_77 = arith.constant 0 : index
      %95 = vector.load %arg7[%c0_75, %c0_76, %c0_77] : memref<10x2x32xf32, #tpu.memory_space<vmem>>, vector<10x2x32xf32>
      tpu.vector_store %arg7[%c0_75, %c0_76, %c0_77], %94 {strides = array<i32>} : memref<10x2x32xf32, #tpu.memory_space<vmem>>, vector<10x2x32xf32>,
    } else {
    }
    %c0 = arith.constant 0 : index
    %c0_1 = arith.constant 0 : index
    %c0_2 = arith.constant 0 : index
    %3 = vector.load %arg2[%c0, %c0_1, %c0_2] : memref<2x8x32xbf16, #tpu.memory_space<vmem>>, vector<2x8x32xbf16>
    %4 = arith.extf %3 : vector<2x8x32xbf16> to vector<2x8x32xf32>
    %c0_3 = arith.constant 0 : index
    %c0_4 = arith.constant 0 : index
    %c0_5 = arith.constant 0 : index
    %5 = vector.load %arg3[%c0_3, %c0_4, %c0_5] : memref<2x8x32xbf16, #tpu.memory_space<vmem>>, vector<2x8x32xbf16>
    %6 = arith.extf %5 : vector<2x8x32xbf16> to vector<2x8x32xf32>
    %7 = arith.subf %4, %6 : vector<2x8x32xf32>
    %c0_6 = arith.constant 0 : index
    %c0_7 = arith.constant 0 : index
    %c0_8 = arith.constant 0 : index
    %8 = vector.load %arg7[%c0_6, %c0_7, %c0_8] : memref<10x2x32xf32, #tpu.memory_space<vmem>>, vector<1x2x32xf32>
    %9 = vector.shape_cast %8 : vector<1x2x32xf32> to vector<2x32xf32>
    %10 = arith.mulf %4, %4 : vector<2x8x32xf32>
    %cst = arith.constant dense<0.000000e+00> : vector<2x32xf32>
    %11 = vector.multi_reduction <add>, %10, %cst [1] : vector<2x8x32xf32> to vector<2x32xf32>
    %12 = arith.addf %9, %11 : vector<2x32xf32>
    %c0_9 = arith.constant 0 : index
    %c0_10 = arith.constant 0 : index
    %c0_11 = arith.constant 0 : index
    %13 = vector.load %arg7[%c0_9, %c0_10, %c0_11] : memref<10x2x32xf32, #tpu.memory_space<vmem>>, vector<1x2x32xf32>
    %14 = vector.shape_cast %13 : vector<1x2x32xf32> to vector<2x32xf32>
    %15 = vector.shape_cast %12 : vector<2x32xf32> to vector<1x2x32xf32>
    tpu.vector_store %arg7[%c0_9, %c0_10, %c0_11], %15 {strides = array<i32>} : memref<10x2x32xf32, #tpu.memory_space<vmem>>, vector<1x2x32xf32>,
    %c1 = arith.constant 1 : index
    %c0_12 = arith.constant 0 : index
    %c0_13 = arith.constant 0 : index
    %16 = vector.load %arg7[%c1, %c0_12, %c0_13] : memref<10x2x32xf32, #tpu.memory_space<vmem>>, vector<1x2x32xf32>
    %17 = vector.shape_cast %16 : vector<1x2x32xf32> to vector<2x32xf32>
    %18 = arith.mulf %6, %6 : vector<2x8x32xf32>
    %cst_14 = arith.constant dense<0.000000e+00> : vector<2x32xf32>
    %19 = vector.multi_reduction <add>, %18, %cst_14 [1] : vector<2x8x32xf32> to vector<2x32xf32>
    %20 = arith.addf %17, %19 : vector<2x32xf32>
    %c1_15 = arith.constant 1 : index
    %c0_16 = arith.constant 0 : index
    %c0_17 = arith.constant 0 : index
    %21 = vector.load %arg7[%c1_15, %c0_16, %c0_17] : memref<10x2x32xf32, #tpu.memory_space<vmem>>, vector<1x2x32xf32>
    %22 = vector.shape_cast %21 : vector<1x2x32xf32> to vector<2x32xf32>
    %23 = vector.shape_cast %20 : vector<2x32xf32> to vector<1x2x32xf32>
    tpu.vector_store %arg7[%c1_15, %c0_16, %c0_17], %23 {strides = array<i32>} : memref<10x2x32xf32, #tpu.memory_space<vmem>>, vector<1x2x32xf32>,
    %c2 = arith.constant 2 : index
    %c0_18 = arith.constant 0 : index
    %c0_19 = arith.constant 0 : index
    %24 = vector.load %arg7[%c2, %c0_18, %c0_19] : memref<10x2x32xf32, #tpu.memory_space<vmem>>, vector<1x2x32xf32>
    %25 = vector.shape_cast %24 : vector<1x2x32xf32> to vector<2x32xf32>
    %26 = arith.mulf %4, %6 : vector<2x8x32xf32>
    %cst_20 = arith.constant dense<0.000000e+00> : vector<2x32xf32>
    %27 = vector.multi_reduction <add>, %26, %cst_20 [1] : vector<2x8x32xf32> to vector<2x32xf32>
    %28 = arith.addf %25, %27 : vector<2x32xf32>
    %c2_21 = arith.constant 2 : index
    %c0_22 = arith.constant 0 : index
    %c0_23 = arith.constant 0 : index
    %29 = vector.load %arg7[%c2_21, %c0_22, %c0_23] : memref<10x2x32xf32, #tpu.memory_space<vmem>>, vector<1x2x32xf32>
    %30 = vector.shape_cast %29 : vector<1x2x32xf32> to vector<2x32xf32>
    %31 = vector.shape_cast %28 : vector<2x32xf32> to vector<1x2x32xf32>
    tpu.vector_store %arg7[%c2_21, %c0_22, %c0_23], %31 {strides = array<i32>} : memref<10x2x32xf32, #tpu.memory_space<vmem>>, vector<1x2x32xf32>,
    %c3 = arith.constant 3 : index
    %c0_24 = arith.constant 0 : index
    %c0_25 = arith.constant 0 : index
    %32 = vector.load %arg7[%c3, %c0_24, %c0_25] : memref<10x2x32xf32, #tpu.memory_space<vmem>>, vector<1x2x32xf32>
    %33 = vector.shape_cast %32 : vector<1x2x32xf32> to vector<2x32xf32>
    %34 = arith.mulf %7, %7 : vector<2x8x32xf32>
    %cst_26 = arith.constant dense<0.000000e+00> : vector<2x32xf32>
    %35 = vector.multi_reduction <add>, %34, %cst_26 [1] : vector<2x8x32xf32> to vector<2x32xf32>
    %36 = arith.addf %33, %35 : vector<2x32xf32>
    %c3_27 = arith.constant 3 : index
    %c0_28 = arith.constant 0 : index
    %c0_29 = arith.constant 0 : index
    %37 = vector.load %arg7[%c3_27, %c0_28, %c0_29] : memref<10x2x32xf32, #tpu.memory_space<vmem>>, vector<1x2x32xf32>
    %38 = vector.shape_cast %37 : vector<1x2x32xf32> to vector<2x32xf32>
    %39 = vector.shape_cast %36 : vector<2x32xf32> to vector<1x2x32xf32>
    tpu.vector_store %arg7[%c3_27, %c0_28, %c0_29], %39 {strides = array<i32>} : memref<10x2x32xf32, #tpu.memory_space<vmem>>, vector<1x2x32xf32>,
    %c4 = arith.constant 4 : index
    %c0_30 = arith.constant 0 : index
    %c0_31 = arith.constant 0 : index
    %40 = vector.load %arg7[%c4, %c0_30, %c0_31] : memref<10x2x32xf32, #tpu.memory_space<vmem>>, vector<1x2x32xf32>
    %41 = vector.shape_cast %40 : vector<1x2x32xf32> to vector<2x32xf32>
    %cst_32 = arith.constant dense<0.000000e+00> : vector<2x32xf32>
    %42 = vector.multi_reduction <add>, %7, %cst_32 [1] : vector<2x8x32xf32> to vector<2x32xf32>
    %43 = arith.addf %41, %42 : vector<2x32xf32>
    %c4_33 = arith.constant 4 : index
    %c0_34 = arith.constant 0 : index
    %c0_35 = arith.constant 0 : index
    %44 = vector.load %arg7[%c4_33, %c0_34, %c0_35] : memref<10x2x32xf32, #tpu.memory_space<vmem>>, vector<1x2x32xf32>
    %45 = vector.shape_cast %44 : vector<1x2x32xf32> to vector<2x32xf32>
    %46 = vector.shape_cast %43 : vector<2x32xf32> to vector<1x2x32xf32>
    tpu.vector_store %arg7[%c4_33, %c0_34, %c0_35], %46 {strides = array<i32>} : memref<10x2x32xf32, #tpu.memory_space<vmem>>, vector<1x2x32xf32>,
    %c0_36 = arith.constant 0 : index
    %c0_37 = arith.constant 0 : index
    %c0_38 = arith.constant 0 : index
    %47 = vector.load %arg4[%c0_36, %c0_37, %c0_38] : memref<2x8x32xbf16, #tpu.memory_space<vmem>>, vector<2x8x32xbf16>
    %48 = arith.extf %47 : vector<2x8x32xbf16> to vector<2x8x32xf32>
    %c0_39 = arith.constant 0 : index
    %c0_40 = arith.constant 0 : index
    %c0_41 = arith.constant 0 : index
    %49 = vector.load %arg5[%c0_39, %c0_40, %c0_41] : memref<2x8x32xbf16, #tpu.memory_space<vmem>>, vector<2x8x32xbf16>
    %50 = arith.extf %49 : vector<2x8x32xbf16> to vector<2x8x32xf32>
    %51 = arith.subf %48, %50 : vector<2x8x32xf32>
    %c5 = arith.constant 5 : index
    %c0_42 = arith.constant 0 : index
    %c0_43 = arith.constant 0 : index
    %52 = vector.load %arg7[%c5, %c0_42, %c0_43] : memref<10x2x32xf32, #tpu.memory_space<vmem>>, vector<1x2x32xf32>
    %53 = vector.shape_cast %52 : vector<1x2x32xf32> to vector<2x32xf32>
    %54 = arith.mulf %48, %48 : vector<2x8x32xf32>
    %cst_44 = arith.constant dense<0.000000e+00> : vector<2x32xf32>
    %55 = vector.multi_reduction <add>, %54, %cst_44 [1] : vector<2x8x32xf32> to vector<2x32xf32>
    %56 = arith.addf %53, %55 : vector<2x32xf32>
    %c5_45 = arith.constant 5 : index
    %c0_46 = arith.constant 0 : index
    %c0_47 = arith.constant 0 : index
    %57 = vector.load %arg7[%c5_45, %c0_46, %c0_47] : memref<10x2x32xf32, #tpu.memory_space<vmem>>, vector<1x2x32xf32>
    %58 = vector.shape_cast %57 : vector<1x2x32xf32> to vector<2x32xf32>
    %59 = vector.shape_cast %56 : vector<2x32xf32> to vector<1x2x32xf32>
    tpu.vector_store %arg7[%c5_45, %c0_46, %c0_47], %59 {strides = array<i32>} : memref<10x2x32xf32, #tpu.memory_space<vmem>>, vector<1x2x32xf32>,
    %c6 = arith.constant 6 : index
    %c0_48 = arith.constant 0 : index
    %c0_49 = arith.constant 0 : index
    %60 = vector.load %arg7[%c6, %c0_48, %c0_49] : memref<10x2x32xf32, #tpu.memory_space<vmem>>, vector<1x2x32xf32>
    %61 = vector.shape_cast %60 : vector<1x2x32xf32> to vector<2x32xf32>
    %62 = arith.mulf %50, %50 : vector<2x8x32xf32>
    %cst_50 = arith.constant dense<0.000000e+00> : vector<2x32xf32>
    %63 = vector.multi_reduction <add>, %62, %cst_50 [1] : vector<2x8x32xf32> to vector<2x32xf32>
    %64 = arith.addf %61, %63 : vector<2x32xf32>
    %c6_51 = arith.constant 6 : index
    %c0_52 = arith.constant 0 : index
    %c0_53 = arith.constant 0 : index
    %65 = vector.load %arg7[%c6_51, %c0_52, %c0_53] : memref<10x2x32xf32, #tpu.memory_space<vmem>>, vector<1x2x32xf32>
    %66 = vector.shape_cast %65 : vector<1x2x32xf32> to vector<2x32xf32>
    %67 = vector.shape_cast %64 : vector<2x32xf32> to vector<1x2x32xf32>
    tpu.vector_store %arg7[%c6_51, %c0_52, %c0_53], %67 {strides = array<i32>} : memref<10x2x32xf32, #tpu.memory_space<vmem>>, vector<1x2x32xf32>,
    %c7 = arith.constant 7 : index
    %c0_54 = arith.constant 0 : index
    %c0_55 = arith.constant 0 : index
    %68 = vector.load %arg7[%c7, %c0_54, %c0_55] : memref<10x2x32xf32, #tpu.memory_space<vmem>>, vector<1x2x32xf32>
    %69 = vector.shape_cast %68 : vector<1x2x32xf32> to vector<2x32xf32>
    %70 = arith.mulf %48, %50 : vector<2x8x32xf32>
    %cst_56 = arith.constant dense<0.000000e+00> : vector<2x32xf32>
    %71 = vector.multi_reduction <add>, %70, %cst_56 [1] : vector<2x8x32xf32> to vector<2x32xf32>
    %72 = arith.addf %69, %71 : vector<2x32xf32>
    %c7_57 = arith.constant 7 : index
    %c0_58 = arith.constant 0 : index
    %c0_59 = arith.constant 0 : index
    %73 = vector.load %arg7[%c7_57, %c0_58, %c0_59] : memref<10x2x32xf32, #tpu.memory_space<vmem>>, vector<1x2x32xf32>
    %74 = vector.shape_cast %73 : vector<1x2x32xf32> to vector<2x32xf32>
    %75 = vector.shape_cast %72 : vector<2x32xf32> to vector<1x2x32xf32>
    tpu.vector_store %arg7[%c7_57, %c0_58, %c0_59], %75 {strides = array<i32>} : memref<10x2x32xf32, #tpu.memory_space<vmem>>, vector<1x2x32xf32>,
    %c8 = arith.constant 8 : index
    %c0_60 = arith.constant 0 : index
    %c0_61 = arith.constant 0 : index
    %76 = vector.load %arg7[%c8, %c0_60, %c0_61] : memref<10x2x32xf32, #tpu.memory_space<vmem>>, vector<1x2x32xf32>
    %77 = vector.shape_cast %76 : vector<1x2x32xf32> to vector<2x32xf32>
    %78 = arith.mulf %51, %51 : vector<2x8x32xf32>
    %cst_62 = arith.constant dense<0.000000e+00> : vector<2x32xf32>
    %79 = vector.multi_reduction <add>, %78, %cst_62 [1] : vector<2x8x32xf32> to vector<2x32xf32>
    %80 = arith.addf %77, %79 : vector<2x32xf32>
    %c8_63 = arith.constant 8 : index
    %c0_64 = arith.constant 0 : index
    %c0_65 = arith.constant 0 : index
    %81 = vector.load %arg7[%c8_63, %c0_64, %c0_65] : memref<10x2x32xf32, #tpu.memory_space<vmem>>, vector<1x2x32xf32>
    %82 = vector.shape_cast %81 : vector<1x2x32xf32> to vector<2x32xf32>
    %83 = vector.shape_cast %80 : vector<2x32xf32> to vector<1x2x32xf32>
    tpu.vector_store %arg7[%c8_63, %c0_64, %c0_65], %83 {strides = array<i32>} : memref<10x2x32xf32, #tpu.memory_space<vmem>>, vector<1x2x32xf32>,
    %c9 = arith.constant 9 : index
    %c0_66 = arith.constant 0 : index
    %c0_67 = arith.constant 0 : index
    %84 = vector.load %arg7[%c9, %c0_66, %c0_67] : memref<10x2x32xf32, #tpu.memory_space<vmem>>, vector<1x2x32xf32>
    %85 = vector.shape_cast %84 : vector<1x2x32xf32> to vector<2x32xf32>
    %cst_68 = arith.constant dense<0.000000e+00> : vector<2x32xf32>
    %86 = vector.multi_reduction <add>, %51, %cst_68 [1] : vector<2x8x32xf32> to vector<2x32xf32>
    %87 = arith.addf %85, %86 : vector<2x32xf32>
    %c9_69 = arith.constant 9 : index
    %c0_70 = arith.constant 0 : index
    %c0_71 = arith.constant 0 : index
    %88 = vector.load %arg7[%c9_69, %c0_70, %c0_71] : memref<10x2x32xf32, #tpu.memory_space<vmem>>, vector<1x2x32xf32>
    %89 = vector.shape_cast %88 : vector<1x2x32xf32> to vector<2x32xf32>
    %90 = vector.shape_cast %87 : vector<2x32xf32> to vector<1x2x32xf32>
    tpu.vector_store %arg7[%c9_69, %c0_70, %c0_71], %90 {strides = array<i32>} : memref<10x2x32xf32, #tpu.memory_space<vmem>>, vector<1x2x32xf32>,
    %c0_i32_72 = arith.constant 0 : i32
    %91 = arith.cmpi eq, %arg1, %c0_i32_72 : i32
    %92 = arith.extui %91 : i1 to i32
    %c0_i32_73 = arith.constant 0 : i32
    %93 = arith.cmpi ne, %92, %c0_i32_73 : i32
    scf.if %93 {
      %c0_74 = arith.constant 0 : index
      %c0_75 = arith.constant 0 : index
      %c0_76 = arith.constant 0 : index
      %94 = vector.load %arg7[%c0_74, %c0_75, %c0_76] : memref<10x2x32xf32, #tpu.memory_space<vmem>>, vector<1x2x32xf32>
      %95 = vector.shape_cast %94 : vector<1x2x32xf32> to vector<2x32xf32>
      %c1_77 = arith.constant 1 : index
      %c0_78 = arith.constant 0 : index
      %c0_79 = arith.constant 0 : index
      %96 = vector.load %arg7[%c1_77, %c0_78, %c0_79] : memref<10x2x32xf32, #tpu.memory_space<vmem>>, vector<1x2x32xf32>
      %97 = vector.shape_cast %96 : vector<1x2x32xf32> to vector<2x32xf32>
      %c2_80 = arith.constant 2 : index
      %c0_81 = arith.constant 0 : index
      %c0_82 = arith.constant 0 : index
      %98 = vector.load %arg7[%c2_80, %c0_81, %c0_82] : memref<10x2x32xf32, #tpu.memory_space<vmem>>, vector<1x2x32xf32>
      %99 = vector.shape_cast %98 : vector<1x2x32xf32> to vector<2x32xf32>
      %c3_83 = arith.constant 3 : index
      %c0_84 = arith.constant 0 : index
      %c0_85 = arith.constant 0 : index
      %100 = vector.load %arg7[%c3_83, %c0_84, %c0_85] : memref<10x2x32xf32, #tpu.memory_space<vmem>>, vector<1x2x32xf32>
      %101 = vector.shape_cast %100 : vector<1x2x32xf32> to vector<2x32xf32>
      %c4_86 = arith.constant 4 : index
      %c0_87 = arith.constant 0 : index
      %c0_88 = arith.constant 0 : index
      %102 = vector.load %arg7[%c4_86, %c0_87, %c0_88] : memref<10x2x32xf32, #tpu.memory_space<vmem>>, vector<1x2x32xf32>
      %103 = vector.shape_cast %102 : vector<1x2x32xf32> to vector<2x32xf32>
      %104 = math.sqrt %101 : vector<2x32xf32>
      %105 = math.sqrt %95 : vector<2x32xf32>
      %cst_89 = arith.constant 9.99999993E-9 : f32
      %106 = vector.broadcast %cst_89 : f32 to vector<2x32xf32>
      %107 = arith.maximumf %105, %106 : vector<2x32xf32>
      %108 = math.sqrt %97 : vector<2x32xf32>
      %cst_90 = arith.constant 9.99999993E-9 : f32
      %109 = vector.broadcast %cst_90 : f32 to vector<2x32xf32>
      %110 = arith.maximumf %108, %109 : vector<2x32xf32>
      %111 = arith.mulf %107, %110 : vector<2x32xf32>
      %112 = arith.divf %99, %111 : vector<2x32xf32>
      %cst_91 = arith.constant 1.000000e+00 : f32
      %113 = vector.broadcast %cst_91 : f32 to vector<2x32xf32>
      %114 = arith.subf %113, %112 : vector<2x32xf32>
      %cst_92 = arith.constant dense<0.000000e+00> : vector<2xf32>
      %115 = vector.multi_reduction <add>, %99, %cst_92 [1] : vector<2x32xf32> to vector<2xf32>
      %116 = vector.shape_cast %115 : vector<2xf32> to vector<2x1xf32>
      %cst_93 = arith.constant dense<0.000000e+00> : vector<2xf32>
      %117 = vector.multi_reduction <add>, %95, %cst_93 [1] : vector<2x32xf32> to vector<2xf32>
      %118 = vector.shape_cast %117 : vector<2xf32> to vector<2x1xf32>
      %119 = math.sqrt %118 : vector<2x1xf32>
      %cst_94 = arith.constant dense<0.000000e+00> : vector<2xf32>
      %120 = vector.multi_reduction <add>, %97, %cst_94 [1] : vector<2x32xf32> to vector<2xf32>
      %121 = vector.shape_cast %120 : vector<2xf32> to vector<2x1xf32>
      %122 = math.sqrt %121 : vector<2x1xf32>
      %cst_95 = arith.constant 9.99999993E-9 : f32
      %123 = vector.broadcast %cst_95 : f32 to vector<2x1xf32>
      %124 = arith.maximumf %119, %123 : vector<2x1xf32>
      %cst_96 = arith.constant 9.99999993E-9 : f32
      %125 = vector.broadcast %cst_96 : f32 to vector<2x1xf32>
      %126 = arith.maximumf %122, %125 : vector<2x1xf32>
      %127 = arith.mulf %124, %126 : vector<2x1xf32>
      %128 = arith.divf %116, %127 : vector<2x1xf32>
      %cst_97 = arith.constant 1.000000e+00 : f32
      %129 = vector.broadcast %cst_97 : f32 to vector<2x1xf32>
      %130 = arith.subf %129, %128 : vector<2x1xf32>
      %cst_98 = arith.constant dense<0.000000e+00> : vector<2xf32>
      %131 = vector.multi_reduction <add>, %101, %cst_98 [1] : vector<2x32xf32> to vector<2xf32>
      %132 = vector.shape_cast %131 : vector<2xf32> to vector<2x1xf32>
      %cst_99 = arith.constant dense<0.000000e+00> : vector<2xf32>
      %133 = vector.multi_reduction <add>, %103, %cst_99 [1] : vector<2x32xf32> to vector<2xf32>
      %134 = vector.shape_cast %133 : vector<2xf32> to vector<2x1xf32>
      %cst_100 = arith.constant 2.000000e-06 : f32
      %135 = vector.broadcast %cst_100 : f32 to vector<2x1xf32>
      %136 = arith.mulf %135, %134 : vector<2x1xf32>
      %137 = arith.addf %132, %136 : vector<2x1xf32>
      %cst_101 = arith.constant 2.560000e-10 : f32
      %138 = vector.broadcast %cst_101 : f32 to vector<2x1xf32>
      %139 = arith.addf %137, %138 : vector<2x1xf32>
      %140 = math.sqrt %139 : vector<2x1xf32>
      %c5_102 = arith.constant 5 : index
      %c0_103 = arith.constant 0 : index
      %c0_104 = arith.constant 0 : index
      %141 = vector.load %arg7[%c5_102, %c0_103, %c0_104] : memref<10x2x32xf32, #tpu.memory_space<vmem>>, vector<1x2x32xf32>
      %142 = vector.shape_cast %141 : vector<1x2x32xf32> to vector<2x32xf32>
      %c6_105 = arith.constant 6 : index
      %c0_106 = arith.constant 0 : index
      %c0_107 = arith.constant 0 : index
      %143 = vector.load %arg7[%c6_105, %c0_106, %c0_107] : memref<10x2x32xf32, #tpu.memory_space<vmem>>, vector<1x2x32xf32>
      %144 = vector.shape_cast %143 : vector<1x2x32xf32> to vector<2x32xf32>
      %c7_108 = arith.constant 7 : index
      %c0_109 = arith.constant 0 : index
      %c0_110 = arith.constant 0 : index
      %145 = vector.load %arg7[%c7_108, %c0_109, %c0_110] : memref<10x2x32xf32, #tpu.memory_space<vmem>>, vector<1x2x32xf32>
      %146 = vector.shape_cast %145 : vector<1x2x32xf32> to vector<2x32xf32>
      %c8_111 = arith.constant 8 : index
      %c0_112 = arith.constant 0 : index
      %c0_113 = arith.constant 0 : index
      %147 = vector.load %arg7[%c8_111, %c0_112, %c0_113] : memref<10x2x32xf32, #tpu.memory_space<vmem>>, vector<1x2x32xf32>
      %148 = vector.shape_cast %147 : vector<1x2x32xf32> to vector<2x32xf32>
      %c9_114 = arith.constant 9 : index
      %c0_115 = arith.constant 0 : index
      %c0_116 = arith.constant 0 : index
      %149 = vector.load %arg7[%c9_114, %c0_115, %c0_116] : memref<10x2x32xf32, #tpu.memory_space<vmem>>, vector<1x2x32xf32>
      %150 = vector.shape_cast %149 : vector<1x2x32xf32> to vector<2x32xf32>
      %151 = math.sqrt %148 : vector<2x32xf32>
      %152 = math.sqrt %142 : vector<2x32xf32>
      %cst_117 = arith.constant 9.99999993E-9 : f32
      %153 = vector.broadcast %cst_117 : f32 to vector<2x32xf32>
      %154 = arith.maximumf %152, %153 : vector<2x32xf32>
      %155 = math.sqrt %144 : vector<2x32xf32>
      %cst_118 = arith.constant 9.99999993E-9 : f32
      %156 = vector.broadcast %cst_118 : f32 to vector<2x32xf32>
      %157 = arith.maximumf %155, %156 : vector<2x32xf32>
      %158 = arith.mulf %154, %157 : vector<2x32xf32>
      %159 = arith.divf %146, %158 : vector<2x32xf32>
      %cst_119 = arith.constant 1.000000e+00 : f32
      %160 = vector.broadcast %cst_119 : f32 to vector<2x32xf32>
      %161 = arith.subf %160, %159 : vector<2x32xf32>
      %cst_120 = arith.constant dense<0.000000e+00> : vector<2xf32>
      %162 = vector.multi_reduction <add>, %146, %cst_120 [1] : vector<2x32xf32> to vector<2xf32>
      %163 = vector.shape_cast %162 : vector<2xf32> to vector<2x1xf32>
      %cst_121 = arith.constant dense<0.000000e+00> : vector<2xf32>
      %164 = vector.multi_reduction <add>, %142, %cst_121 [1] : vector<2x32xf32> to vector<2xf32>
      %165 = vector.shape_cast %164 : vector<2xf32> to vector<2x1xf32>
      %166 = math.sqrt %165 : vector<2x1xf32>
      %cst_122 = arith.constant dense<0.000000e+00> : vector<2xf32>
      %167 = vector.multi_reduction <add>, %144, %cst_122 [1] : vector<2x32xf32> to vector<2xf32>
      %168 = vector.shape_cast %167 : vector<2xf32> to vector<2x1xf32>
      %169 = math.sqrt %168 : vector<2x1xf32>
      %cst_123 = arith.constant 9.99999993E-9 : f32
      %170 = vector.broadcast %cst_123 : f32 to vector<2x1xf32>
      %171 = arith.maximumf %166, %170 : vector<2x1xf32>
      %cst_124 = arith.constant 9.99999993E-9 : f32
      %172 = vector.broadcast %cst_124 : f32 to vector<2x1xf32>
      %173 = arith.maximumf %169, %172 : vector<2x1xf32>
      %174 = arith.mulf %171, %173 : vector<2x1xf32>
      %175 = arith.divf %163, %174 : vector<2x1xf32>
      %cst_125 = arith.constant 1.000000e+00 : f32
      %176 = vector.broadcast %cst_125 : f32 to vector<2x1xf32>
      %177 = arith.subf %176, %175 : vector<2x1xf32>
      %cst_126 = arith.constant dense<0.000000e+00> : vector<2xf32>
      %178 = vector.multi_reduction <add>, %148, %cst_126 [1] : vector<2x32xf32> to vector<2xf32>
      %179 = vector.shape_cast %178 : vector<2xf32> to vector<2x1xf32>
      %cst_127 = arith.constant dense<0.000000e+00> : vector<2xf32>
      %180 = vector.multi_reduction <add>, %150, %cst_127 [1] : vector<2x32xf32> to vector<2xf32>
      %181 = vector.shape_cast %180 : vector<2xf32> to vector<2x1xf32>
      %cst_128 = arith.constant 2.000000e-06 : f32
      %182 = vector.broadcast %cst_128 : f32 to vector<2x1xf32>
      %183 = arith.mulf %182, %181 : vector<2x1xf32>
      %184 = arith.addf %179, %183 : vector<2x1xf32>
      %cst_129 = arith.constant 2.560000e-10 : f32
      %185 = vector.broadcast %cst_129 : f32 to vector<2x1xf32>
      %186 = arith.addf %184, %185 : vector<2x1xf32>
      %187 = math.sqrt %186 : vector<2x1xf32>
      %188 = arith.addf %140, %187 : vector<2x1xf32>
      %cst_130 = arith.constant 5.000000e-01 : f32
      %189 = vector.broadcast %cst_130 : f32 to vector<2x1xf32>
      %190 = arith.mulf %189, %188 : vector<2x1xf32>
      %191 = arith.addf %116, %163 : vector<2x1xf32>
      %cst_131 = arith.constant 5.000000e-01 : f32
      %192 = vector.broadcast %cst_131 : f32 to vector<2x1xf32>
      %193 = arith.mulf %192, %191 : vector<2x1xf32>
      %194 = arith.addf %130, %177 : vector<2x1xf32>
      %cst_132 = arith.constant 5.000000e-01 : f32
      %195 = vector.broadcast %cst_132 : f32 to vector<2x1xf32>
      %196 = arith.mulf %195, %194 : vector<2x1xf32>
      %197 = arith.addf %104, %151 : vector<2x32xf32>
      %cst_133 = arith.constant 5.000000e-01 : f32
      %198 = vector.broadcast %cst_133 : f32 to vector<2x32xf32>
      %199 = arith.mulf %198, %197 : vector<2x32xf32>
      %200 = arith.addf %99, %146 : vector<2x32xf32>
      %cst_134 = arith.constant 5.000000e-01 : f32
      %201 = vector.broadcast %cst_134 : f32 to vector<2x32xf32>
      %202 = arith.mulf %201, %200 : vector<2x32xf32>
      %203 = arith.addf %114, %161 : vector<2x32xf32>
      %cst_135 = arith.constant 5.000000e-01 : f32
      %204 = vector.broadcast %cst_135 : f32 to vector<2x32xf32>
      %205 = arith.mulf %204, %203 : vector<2x32xf32>
      %cst_136 = arith.constant 0.000000e+00 : f32
      %206 = vector.broadcast %cst_136 : f32 to vector<2x512xf32>
      %c0_137 = arith.constant 0 : index
      %c0_138 = arith.constant 0 : index
      %207 = vector.load %arg6[%c0_137, %c0_138] : memref<2x512xf32, #tpu.memory_space<vmem>>, vector<2x512xf32>
      tpu.vector_store %arg6[%c0_137, %c0_138], %206 {strides = array<i32>} : memref<2x512xf32, #tpu.memory_space<vmem>>, vector<2x512xf32>,
      %208 = tpu.iota {dimensions = array<i32: 1>} : vector<2x128xi32>
      %c0_i32_139 = arith.constant 0 : i32
      %209 = vector.broadcast %c0_i32_139 : i32 to vector<2x128xi32>
      %210 = arith.cmpi eq, %208, %209 : vector<2x128xi32>
      %cst_140 = arith.constant 0.000000e+00 : f32
      %211 = vector.shape_cast %190 : vector<2x1xf32> to vector<2x1xf32>
      %212 = vector.broadcast %211 : vector<2x1xf32> to vector<2x128xf32>
      %213 = vector.broadcast %cst_140 : f32 to vector<2x128xf32>
      %214 = arith.select %210, %212, %213 : vector<2x128xi1>, vector<2x128xf32>
      %c1_i32 = arith.constant 1 : i32
      %215 = vector.broadcast %c1_i32 : i32 to vector<2x128xi32>
      %216 = arith.cmpi eq, %208, %215 : vector<2x128xi32>
      %217 = vector.shape_cast %193 : vector<2x1xf32> to vector<2x1xf32>
      %218 = vector.broadcast %217 : vector<2x1xf32> to vector<2x128xf32>
      %219 = arith.select %216, %218, %214 : vector<2x128xi1>, vector<2x128xf32>
      %c2_i32 = arith.constant 2 : i32
      %220 = vector.broadcast %c2_i32 : i32 to vector<2x128xi32>
      %221 = arith.cmpi eq, %208, %220 : vector<2x128xi32>
      %222 = vector.shape_cast %196 : vector<2x1xf32> to vector<2x1xf32>
      %223 = vector.broadcast %222 : vector<2x1xf32> to vector<2x128xf32>
      %224 = arith.select %221, %223, %219 : vector<2x128xi1>, vector<2x128xf32>
      %c0_141 = arith.constant 0 : index
      %c0_142 = arith.constant 0 : index
      %225 = vector.load %arg6[%c0_141, %c0_142] : memref<2x512xf32, #tpu.memory_space<vmem>>, vector<2x128xf32>
      tpu.vector_store %arg6[%c0_141, %c0_142], %224 {strides = array<i32>} : memref<2x512xf32, #tpu.memory_space<vmem>>, vector<2x128xf32>,
      %c0_143 = arith.constant 0 : index
      %c128 = arith.constant 128 : index
      %226 = vector.load %arg6[%c0_143, %c128] : memref<2x512xf32, #tpu.memory_space<vmem>>, vector<2x32xf32>
      tpu.vector_store %arg6[%c0_143, %c128], %199 {strides = array<i32>} : memref<2x512xf32, #tpu.memory_space<vmem>>, vector<2x32xf32>,
      %c0_144 = arith.constant 0 : index
      %c256 = arith.constant 256 : index
      %227 = vector.load %arg6[%c0_144, %c256] : memref<2x512xf32, #tpu.memory_space<vmem>>, vector<2x32xf32>
      tpu.vector_store %arg6[%c0_144, %c256], %202 {strides = array<i32>} : memref<2x512xf32, #tpu.memory_space<vmem>>, vector<2x32xf32>,
      %c0_145 = arith.constant 0 : index
      %c384 = arith.constant 384 : index
      %228 = vector.load %arg6[%c0_145, %c384] : memref<2x512xf32, #tpu.memory_space<vmem>>, vector<2x32xf32>
      tpu.vector_store %arg6[%c0_145, %c384], %205 {strides = array<i32>} : memref<2x512xf32, #tpu.memory_space<vmem>>, vector<2x32xf32>,
    } else {
    }
    return
  }
  func.func @transform_0(%arg0: i32, %arg1: i32) -> (i32, i32, i32) {
    %c0_i32 = arith.constant 0 : i32
    %c0_i32_0 = arith.constant 0 : i32
    return %arg0, %arg1, %c0_i32 : i32, i32, i32
  }
  func.func @transform_1(%arg0: i32, %arg1: i32) -> (i32, i32, i32) {
    %c0_i32 = arith.constant 0 : i32
    %c0_i32_0 = arith.constant 0 : i32
    return %arg0, %arg1, %c0_i32 : i32, i32, i32
  }
  func.func @transform_2(%arg0: i32, %arg1: i32) -> (i32, i32, i32) {
    %c0_i32 = arith.constant 0 : i32
    %c0_i32_0 = arith.constant 0 : i32
    return %arg0, %arg1, %c0_i32 : i32, i32, i32
  }
  func.func @transform_3(%arg0: i32, %arg1: i32) -> (i32, i32, i32) {
    %c0_i32 = arith.constant 0 : i32
    %c0_i32_0 = arith.constant 0 : i32
    return %arg0, %arg1, %c0_i32 : i32, i32, i32
  }
  func.func @transform_4(%arg0: i32, %arg1: i32) -> (i32, i32) {
    %c0_i32 = arith.constant 0 : i32
    %c0_i32_0 = arith.constant 0 : i32
    return %arg0, %c0_i32 : i32, i32
  }
}

</mosaic_0001>

<llo_original>
// kernel: _lambda_.1
$region0: #{_lambda_.1}
  #allocation0 [shape = 'u32[]', space=smem, size = 0x4, offset = 0x4, fixed_abs, tag = 'smem constant byte address 0x4 - core index']
  #allocation1 [shape = 'u32[144,128]{1,0:T(1,128)}', space=vmem, size = 0x12000, scoped, tag = 'internal scratch']
  #allocation2 [shape = 'f32[10,2,32]{2,1,0:T(2,128)}', space=vmem, size = 0x2800, scoped, tag = 'scratch operand']
  %s0 = inlined_call_operand.vmem [shape: bf16[2,8,32], index: 0, kind: input, shape index: {}]
  %s1 = inlined_call_operand.vmem [shape: bf16[2,8,32], index: 1, kind: input, shape index: {}]
  %s2 = inlined_call_operand.vmem [shape: bf16[2,8,32], index: 2, kind: input, shape index: {}]
  %s3 = inlined_call_operand.vmem [shape: bf16[2,8,32], index: 3, kind: input, shape index: {}]
  %s4 = inlined_call_operand.vmem [shape: f32[2,512], index: 4, kind: output, shape index: {}]
  %s5 = sld [smem:[#allocation0]]
  $region34: #{_lambda_.1} parent=0
    _
  %s7 = ssub.s32 1, %s5
  %s8 = scalar_select 0, %s7, %s5
  // Predicated region
  $region2: #{_lambda_.1} parent=0 // pred_check
    _
  $region3: #{_lambda_.1} parent=0 // pred_check_branch
    %10 = sbr.rel (0) target = $region5
  $region4: #{_lambda_.1} parent=0 // pred_region
    _
  $region5: #{_lambda_.1} parent=0 // pred_fallthru
    _
  // Predicated region
  $region6: #{_lambda_.1} parent=0 // pred_check
    _
  $region7: #{_lambda_.1} parent=0 // pred_check_branch
    %12 = sbr.rel (0) target = $region9
  $region8: #{_lambda_.1} parent=0 // pred_region
    _
  $region9: #{_lambda_.1} parent=0 // pred_fallthru
    _
  // Predicated region
  $region10: #{_lambda_.1} parent=0 // pred_check
    _
  $region11: #{_lambda_.1} parent=0 // pred_check_branch
    %14 = sbr.rel (0) target = $region13
  $region12: #{_lambda_.1} parent=0 // pred_region
    _
  $region13: #{_lambda_.1} parent=0 // pred_fallthru
    _
  // Predicated region
  $region14: #{_lambda_.1} parent=0 // pred_check
    _
  $region15: #{_lambda_.1} parent=0 // pred_check_branch
    %16 = sbr.rel (0) target = $region17
  $region16: #{_lambda_.1} parent=0 // pred_region
    _
  $region17: #{_lambda_.1} parent=0 // pred_fallthru
    _
  %p17 = scmp.eq.s32.totalorder 0, 0
  // Predicated region
  $region18: #{_lambda_.1} parent=0 // pred_check
    %p18 = pneg %p17
  $region19: #{_lambda_.1} parent=0 // pred_check_branch
    %20 = sbr.rel (%p18) target = $region21
  $region20: #{_lambda_.1} parent=0 // pred_region
    %vm21 = vcmask 254976
    %22 = vst.msk [vmem:[#allocation2] sm:$0x3] %vm21, 0.0
    %23 = vst.msk [vmem:[#allocation2 + $0x2] sm:$0x3] %vm21, 0.0
    %24 = vst.msk [vmem:[#allocation2 + $0x4] sm:$0x3] %vm21, 0.0
    %25 = vst.msk [vmem:[#allocation2 + $0x6] sm:$0x3] %vm21, 0.0
    %26 = vst.msk [vmem:[#allocation2 + $0x8] sm:$0x3] %vm21, 0.0
    %27 = vst.msk [vmem:[#allocation2 + $0xa] sm:$0x3] %vm21, 0.0
    %28 = vst.msk [vmem:[#allocation2 + $0xc] sm:$0x3] %vm21, 0.0
    %29 = vst.msk [vmem:[#allocation2 + $0xe] sm:$0x3] %vm21, 0.0
    %30 = vst.msk [vmem:[#allocation2 + $0x10] sm:$0x3] %vm21, 0.0
    %31 = vst.msk [vmem:[#allocation2 + $0x12] sm:$0x3] %vm21, 0.0
  $region21: #{_lambda_.1} parent=0 // pred_fallthru
    _
  %v32 = vld [vmem:[%s0] sm:$0xf]
  %v33 = vld [vmem:[%s0 + $0x4] sm:$0xf]
  %v34 = vunpack.c.l.bf16 %v32
  %v35 = vunpack.c.l.bf16 %v33
  %v36 = vld [vmem:[%s1] sm:$0xf]
  %v37 = vld [vmem:[%s1 + $0x4] sm:$0xf]
  %v38 = vunpack.c.l.bf16 %v36
  %v39 = vunpack.c.l.bf16 %v37
  %v40 = vsub.f32 %v34, %v38
  %v41 = vsub.f32 %v35, %v39
  %v42 = vld [vmem:[#allocation2] sm:$0x3]
  %v43 = vmul.f32 %v34, %v34
  %v44 = vmul.f32 %v35, %v35
  %vm45 = vcmask 261120
  %v46 = vsel %vm45, %v43, 0.0
  %v47 = vrot.slane %v46, 4
  %v48 = vadd.f32 %v46, %v47
  %v49 = vrot.slane %v48, 2
  %v50 = vadd.f32 %v48, %v49
  %v51 = vrot.slane %v50, 1
  %v52 = vadd.f32 %v50, %v51
  %v53 = vsel %vm45, %v44, 0.0
  %v54 = vrot.slane %v53, 4
  %v55 = vadd.f32 %v53, %v54
  %v56 = vrot.slane %v55, 2
  %v57 = vadd.f32 %v55, %v56
  %v58 = vrot.slane %v57, 1
  %v59 = vadd.f32 %v57, %v58
  %vm62 = vcmask 1041409
  %v63 = vsel %vm62, %v59, %v52
  %v65 = vadd.f32 %v42, %v63
  %vm66 = vcmask 254976
  %67 = vst.msk [vmem:[#allocation2] sm:$0x3] %vm66, %v65
  %s68 = scalar_lea.vmem [#allocation2], 2
  %v69 = vld [vmem:[%s68] sm:$0x3]
  %v70 = vmul.f32 %v38, %v38
  %v71 = vmul.f32 %v39, %v39
  %v72 = vsel %vm45, %v70, 0.0
  %v73 = vrot.slane %v72, 4
  %v74 = vadd.f32 %v72, %v73
  %v75 = vrot.slane %v74, 2
  %v76 = vadd.f32 %v74, %v75
  %v77 = vrot.slane %v76, 1
  %v78 = vadd.f32 %v76, %v77
  %v79 = vsel %vm45, %v71, 0.0
  %v80 = vrot.slane %v79, 4
  %v81 = vadd.f32 %v79, %v80
  %v82 = vrot.slane %v81, 2
  %v83 = vadd.f32 %v81, %v82
  %v84 = vrot.slane %v83, 1
  %v85 = vadd.f32 %v83, %v84
  %v88 = vsel %vm62, %v85, %v78
  %v90 = vadd.f32 %v69, %v88
  %91 = vst.msk [vmem:[%s68] sm:$0x3] %vm66, %v90
  %s92 = scalar_lea.vmem [#allocation2], 4
  %v93 = vld [vmem:[%s92] sm:$0x3]
  %v94 = vmul.f32 %v34, %v38
  %v95 = vmul.f32 %v35, %v39
  %v96 = vsel %vm45, %v94, 0.0
  %v97 = vrot.slane %v96, 4
  %v98 = vadd.f32 %v96, %v97
  %v99 = vrot.slane %v98, 2
  %v100 = vadd.f32 %v98, %v99
  %v101 = vrot.slane %v100, 1
  %v102 = vadd.f32 %v100, %v101
  %v103 = vsel %vm45, %v95, 0.0
  %v104 = vrot.slane %v103, 4
  %v105 = vadd.f32 %v103, %v104
  %v106 = vrot.slane %v105, 2
  %v107 = vadd.f32 %v105, %v106
  %v108 = vrot.slane %v107, 1
  %v109 = vadd.f32 %v107, %v108
  %v112 = vsel %vm62, %v109, %v102
  %v114 = vadd.f32 %v93, %v112
  %115 = vst.msk [vmem:[%s92] sm:$0x3] %vm66, %v114
  %s116 = scalar_lea.vmem [#allocation2], 6
  %v117 = vld [vmem:[%s116] sm:$0x3]
  %v118 = vmul.f32 %v40, %v40
  %v119 = vmul.f32 %v41, %v41
  %v120 = vsel %vm45, %v118, 0.0
  %v121 = vrot.slane %v120, 4
  %v122 = vadd.f32 %v120, %v121
  %v123 = vrot.slane %v122, 2
  %v124 = vadd.f32 %v122, %v123
  %v125 = vrot.slane %v124, 1
  %v126 = vadd.f32 %v124, %v125
  %v127 = vsel %vm45, %v119, 0.0
  %v128 = vrot.slane %v127, 4
  %v129 = vadd.f32 %v127, %v128
  %v130 = vrot.slane %v129, 2
  %v131 = vadd.f32 %v129, %v130
  %v132 = vrot.slane %v131, 1
  %v133 = vadd.f32 %v131, %v132
  %v136 = vsel %vm62, %v133, %v126
  %v138 = vadd.f32 %v117, %v136
  %139 = vst.msk [vmem:[%s116] sm:$0x3] %vm66, %v138
  %s140 = scalar_lea.vmem [#allocation2], 8
  %v141 = vld [vmem:[%s140] sm:$0x3]
  %v142 = vsel %vm45, %v40, 0.0
  %v143 = vrot.slane %v142, 4
  %v144 = vadd.f32 %v142, %v143
  %v145 = vrot.slane %v144, 2
  %v146 = vadd.f32 %v144, %v145
  %v147 = vrot.slane %v146, 1
  %v148 = vadd.f32 %v146, %v147
  %v149 = vsel %vm45, %v41, 0.0
  %v150 = vrot.slane %v149, 4
  %v151 = vadd.f32 %v149, %v150
  %v152 = vrot.slane %v151, 2
  %v153 = vadd.f32 %v151, %v152
  %v154 = vrot.slane %v153, 1
  %v155 = vadd.f32 %v153, %v154
  %v158 = vsel %vm62, %v155, %v148
  %v160 = vadd.f32 %v141, %v158
  %161 = vst.msk [vmem:[%s140] sm:$0x3] %vm66, %v160
  %v162 = vld [vmem:[%s2] sm:$0xf]
  %v163 = vld [vmem:[%s2 + $0x4] sm:$0xf]
  %v164 = vunpack.c.l.bf16 %v162
  %v165 = vunpack.c.l.bf16 %v163
  %v166 = vld [vmem:[%s3] sm:$0xf]
  %v167 = vld [vmem:[%s3 + $0x4] sm:$0xf]
  %v168 = vunpack.c.l.bf16 %v166
  %v169 = vunpack.c.l.bf16 %v167
  %v170 = vsub.f32 %v164, %v168
  %v171 = vsub.f32 %v165, %v169
  %s172 = scalar_lea.vmem [#allocation2], 10
  %v173 = vld [vmem:[%s172] sm:$0x3]
  %v174 = vmul.f32 %v164, %v164
  %v175 = vmul.f32 %v165, %v165
  %v176 = vsel %vm45, %v174, 0.0
  %v177 = vrot.slane %v176, 4
  %v178 = vadd.f32 %v176, %v177
  %v179 = vrot.slane %v178, 2
  %v180 = vadd.f32 %v178, %v179
  %v181 = vrot.slane %v180, 1
  %v182 = vadd.f32 %v180, %v181
  %v183 = vsel %vm45, %v175, 0.0
  %v184 = vrot.slane %v183, 4
  %v185 = vadd.f32 %v183, %v184
  %v186 = vrot.slane %v185, 2
  %v187 = vadd.f32 %v185, %v186
  %v188 = vrot.slane %v187, 1
  %v189 = vadd.f32 %v187, %v188
  %v192 = vsel %vm62, %v189, %v182
  %v194 = vadd.f32 %v173, %v192
  %195 = vst.msk [vmem:[%s172] sm:$0x3] %vm66, %v194
  %s196 = scalar_lea.vmem [#allocation2], 12
  %v197 = vld [vmem:[%s196] sm:$0x3]
  %v198 = vmul.f32 %v168, %v168
  %v199 = vmul.f32 %v169, %v169
  %v200 = vsel %vm45, %v198, 0.0
  %v201 = vrot.slane %v200, 4
  %v202 = vadd.f32 %v200, %v201
  %v203 = vrot.slane %v202, 2
  %v204 = vadd.f32 %v202, %v203
  %v205 = vrot.slane %v204, 1
  %v206 = vadd.f32 %v204, %v205
  %v207 = vsel %vm45, %v199, 0.0
  %v208 = vrot.slane %v207, 4
  %v209 = vadd.f32 %v207, %v208
  %v210 = vrot.slane %v209, 2
  %v211 = vadd.f32 %v209, %v210
  %v212 = vrot.slane %v211, 1
  %v213 = vadd.f32 %v211, %v212
  %v216 = vsel %vm62, %v213, %v206
  %v218 = vadd.f32 %v197, %v216
  %219 = vst.msk [vmem:[%s196] sm:$0x3] %vm66, %v218
  %s220 = scalar_lea.vmem [#allocation2], 14
  %v221 = vld [vmem:[%s220] sm:$0x3]
  %v222 = vmul.f32 %v164, %v168
  %v223 = vmul.f32 %v165, %v169
  %v224 = vsel %vm45, %v222, 0.0
  %v225 = vrot.slane %v224, 4
  %v226 = vadd.f32 %v224, %v225
  %v227 = vrot.slane %v226, 2
  %v228 = vadd.f32 %v226, %v227
  %v229 = vrot.slane %v228, 1
  %v230 = vadd.f32 %v228, %v229
  %v231 = vsel %vm45, %v223, 0.0
  %v232 = vrot.slane %v231, 4
  %v233 = vadd.f32 %v231, %v232
  %v234 = vrot.slane %v233, 2
  %v235 = vadd.f32 %v233, %v234
  %v236 = vrot.slane %v235, 1
  %v237 = vadd.f32 %v235, %v236
  %v240 = vsel %vm62, %v237, %v230
  %v242 = vadd.f32 %v221, %v240
  %243 = vst.msk [vmem:[%s220] sm:$0x3] %vm66, %v242
  %s244 = scalar_lea.vmem [#allocation2], 16
  %v245 = vld [vmem:[%s244] sm:$0x3]
  %v246 = vmul.f32 %v170, %v170
  %v247 = vmul.f32 %v171, %v171
  %v248 = vsel %vm45, %v246, 0.0
  %v249 = vrot.slane %v248, 4
  %v250 = vadd.f32 %v248, %v249
  %v251 = vrot.slane %v250, 2
  %v252 = vadd.f32 %v250, %v251
  %v253 = vrot.slane %v252, 1
  %v254 = vadd.f32 %v252, %v253
  %v255 = vsel %vm45, %v247, 0.0
  %v256 = vrot.slane %v255, 4
  %v257 = vadd.f32 %v255, %v256
  %v258 = vrot.slane %v257, 2
  %v259 = vadd.f32 %v257, %v258
  %v260 = vrot.slane %v259, 1
  %v261 = vadd.f32 %v259, %v260
  %v264 = vsel %vm62, %v261, %v254
  %v266 = vadd.f32 %v245, %v264
  %267 = vst.msk [vmem:[%s244] sm:$0x3] %vm66, %v266
  %s268 = scalar_lea.vmem [#allocation2], 18
  %v269 = vld [vmem:[%s268] sm:$0x3]
  %v270 = vsel %vm45, %v170, 0.0
  %v271 = vrot.slane %v270, 4
  %v272 = vadd.f32 %v270, %v271
  %v273 = vrot.slane %v272, 2
  %v274 = vadd.f32 %v272, %v273
  %v275 = vrot.slane %v274, 1
  %v276 = vadd.f32 %v274, %v275
  %v277 = vsel %vm45, %v171, 0.0
  %v278 = vrot.slane %v277, 4
  %v279 = vadd.f32 %v277, %v278
  %v280 = vrot.slane %v279, 2
  %v281 = vadd.f32 %v279, %v280
  %v282 = vrot.slane %v281, 1
  %v283 = vadd.f32 %v281, %v282
  %v286 = vsel %vm62, %v283, %v276
  %v288 = vadd.f32 %v269, %v286
  %289 = vst.msk [vmem:[%s268] sm:$0x3] %vm66, %v288
  // Predicated region
  $region22: #{_lambda_.1} parent=0 // pred_check
    %p290 = pneg %p17
  $region23: #{_lambda_.1} parent=0 // pred_check_branch
    %292 = sbr.rel (%p290) target = $region25
  $region24: #{_lambda_.1} parent=0 // pred_region
    %v293 = vld [vmem:[#allocation2] sm:$0x3]
    %v294 = vld [vmem:[%s68] sm:$0x3]
    %v295 = vld [vmem:[%s92] sm:$0x3]
    %v296 = vld [vmem:[%s116] sm:$0x3]
    %v297 = vld [vmem:[%s140] sm:$0x3]
    %v298 = vrsqrt.pop %v296
    %v299 = vmul.f32 %v296, %v298
    %vm300 = vcmp.eq.f32.partialorder %v296, inf
    %v301 = vsel %vm300, %v296, %v299
    %vm302 = vcmp.eq.f32.partialorder %v296, 0.0
    %v303 = vand.u32 %v296, 2147483648
    %v304 = vsel %vm302, %v303, %v301
    %v305 = vrsqrt.pop %v293
    %v306 = vmul.f32 %v293, %v305
    %vm307 = vcmp.eq.f32.partialorder %v293, inf
    %v308 = vsel %vm307, %v293, %v306
    %vm309 = vcmp.eq.f32.partialorder %v293, 0.0
    %v310 = vand.u32 %v293, 2147483648
    %v311 = vsel %vm309, %v310, %v308
    %v312 = vmax.f32 %v311, 1e-08
    %v313 = vrsqrt.pop %v294
    %v314 = vmul.f32 %v294, %v313
    %vm315 = vcmp.eq.f32.partialorder %v294, inf
    %v316 = vsel %vm315, %v294, %v314
    %vm317 = vcmp.eq.f32.partialorder %v294, 0.0
    %v318 = vand.u32 %v294, 2147483648
    %v319 = vsel %vm317, %v318, %v316
    %v320 = vmax.f32 %v319, 1e-08
    %v321 = vmul.f32 %v312, %v320
    %v322 = vrcp.pop %v321
    %v323 = vmul.f32 %v295, %v322
    %v324 = vsub.f32 1.0, %v323
    %v325 = vsel %vm66, %v295, 0.0
    %326 = vadd.xlane.f32.xlu0 %v325
    %v327 = vpop.xlane.xlu0 %326
    %v328 = vsel %vm66, %v293, 0.0
    %329 = vadd.xlane.f32.xlu0 %v328
    %v330 = vpop.xlane.xlu0 %329
    %v331 = vrsqrt.pop %v330
    %v332 = vmul.f32 %v330, %v331
    %vm333 = vcmp.eq.f32.partialorder %v330, inf
    %v334 = vsel %vm333, %v330, %v332
    %vm335 = vcmp.eq.f32.partialorder %v330, 0.0
    %v336 = vand.u32 %v330, 2147483648
    %v337 = vsel %vm335, %v336, %v334
    %v338 = vsel %vm66, %v294, 0.0
    %339 = vadd.xlane.f32.xlu0 %v338
    %v340 = vpop.xlane.xlu0 %339
    %v341 = vrsqrt.pop %v340
    %v342 = vmul.f32 %v340, %v341
    %vm343 = vcmp.eq.f32.partialorder %v340, inf
    %v344 = vsel %vm343, %v340, %v342
    %vm345 = vcmp.eq.f32.partialorder %v340, 0.0
    %v346 = vand.u32 %v340, 2147483648
    %v347 = vsel %vm345, %v346, %v344
    %v348 = vmax.f32 %v337, 1e-08
    %v349 = vmax.f32 %v347, 1e-08
    %v350 = vmul.f32 %v348, %v349
    %v351 = vrcp.pop %v350
    %v352 = vmul.f32 %v327, %v351
    %v353 = vsub.f32 1.0, %v352
    %v354 = vsel %vm66, %v296, 0.0
    %355 = vadd.xlane.f32.xlu0 %v354
    %v356 = vpop.xlane.xlu0 %355
    %v357 = vsel %vm66, %v297, 0.0
    %358 = vadd.xlane.f32.xlu0 %v357
    %v359 = vpop.xlane.xlu0 %358
    %v360 = vmul.f32 %v359, 2e-06
    %v361 = vadd.f32 %v356, %v360
    %v362 = vadd.f32 %v361, 2.56e-10
    %v363 = vrsqrt.pop %v362
    %v364 = vmul.f32 %v362, %v363
    %vm365 = vcmp.eq.f32.partialorder %v362, inf
    %v366 = vsel %vm365, %v362, %v364
    %vm367 = vcmp.eq.f32.partialorder %v362, 0.0
    %v368 = vand.u32 %v362, 2147483648
    %v369 = vsel %vm367, %v368, %v366
    %v370 = vld [vmem:[%s172] sm:$0x3]
    %v371 = vld [vmem:[%s196] sm:$0x3]
    %v372 = vld [vmem:[%s220] sm:$0x3]
    %v373 = vld [vmem:[%s244] sm:$0x3]
    %v374 = vld [vmem:[%s268] sm:$0x3]
    %v375 = vrsqrt.pop %v373
    %v376 = vmul.f32 %v373, %v375
    %vm377 = vcmp.eq.f32.partialorder %v373, inf
    %v378 = vsel %vm377, %v373, %v376
    %vm379 = vcmp.eq.f32.partialorder %v373, 0.0
    %v380 = vand.u32 %v373, 2147483648
    %v381 = vsel %vm379, %v380, %v378
    %v382 = vrsqrt.pop %v370
    %v383 = vmul.f32 %v370, %v382
    %vm384 = vcmp.eq.f32.partialorder %v370, inf
    %v385 = vsel %vm384, %v370, %v383
    %vm386 = vcmp.eq.f32.partialorder %v370, 0.0
    %v387 = vand.u32 %v370, 2147483648
    %v388 = vsel %vm386, %v387, %v385
    %v389 = vmax.f32 %v388, 1e-08
    %v390 = vrsqrt.pop %v371
    %v391 = vmul.f32 %v371, %v390
    %vm392 = vcmp.eq.f32.partialorder %v371, inf
    %v393 = vsel %vm392, %v371, %v391
    %vm394 = vcmp.eq.f32.partialorder %v371, 0.0
    %v395 = vand.u32 %v371, 2147483648
    %v396 = vsel %vm394, %v395, %v393
    %v397 = vmax.f32 %v396, 1e-08
    %v398 = vmul.f32 %v389, %v397
    %v399 = vrcp.pop %v398
    %v400 = vmul.f32 %v372, %v399
    %v401 = vsub.f32 1.0, %v400
    %v402 = vsel %vm66, %v372, 0.0
    %403 = vadd.xlane.f32.xlu0 %v402
    %v404 = vpop.xlane.xlu0 %403
    %v405 = vsel %vm66, %v370, 0.0
    %406 = vadd.xlane.f32.xlu0 %v405
    %v407 = vpop.xlane.xlu0 %406
    %v408 = vrsqrt.pop %v407
    %v409 = vmul.f32 %v407, %v408
    %vm410 = vcmp.eq.f32.partialorder %v407, inf
    %v411 = vsel %vm410, %v407, %v409
    %vm412 = vcmp.eq.f32.partialorder %v407, 0.0
    %v413 = vand.u32 %v407, 2147483648
    %v414 = vsel %vm412, %v413, %v411
    %v415 = vsel %vm66, %v371, 0.0
    %416 = vadd.xlane.f32.xlu0 %v415
    %v417 = vpop.xlane.xlu0 %416
    %v418 = vrsqrt.pop %v417
    %v419 = vmul.f32 %v417, %v418
    %vm420 = vcmp.eq.f32.partialorder %v417, inf
    %v421 = vsel %vm420, %v417, %v419
    %vm422 = vcmp.eq.f32.partialorder %v417, 0.0
    %v423 = vand.u32 %v417, 2147483648
    %v424 = vsel %vm422, %v423, %v421
    %v425 = vmax.f32 %v414, 1e-08
    %v426 = vmax.f32 %v424, 1e-08
    %v427 = vmul.f32 %v425, %v426
    %v428 = vrcp.pop %v427
    %v429 = vmul.f32 %v404, %v428
    %v430 = vsub.f32 1.0, %v429
    %v431 = vsel %vm66, %v373, 0.0
    %432 = vadd.xlane.f32.xlu0 %v431
    %v433 = vpop.xlane.xlu0 %432
    %v434 = vsel %vm66, %v374, 0.0
    %435 = vadd.xlane.f32.xlu0 %v434
    %v436 = vpop.xlane.xlu0 %435
    %v437 = vmul.f32 %v436, 2e-06
    %v438 = vadd.f32 %v433, %v437
    %v439 = vadd.f32 %v438, 2.56e-10
    %v440 = vrsqrt.pop %v439
    %v441 = vmul.f32 %v439, %v440
    %vm442 = vcmp.eq.f32.partialorder %v439, inf
    %v443 = vsel %vm442, %v439, %v441
    %vm444 = vcmp.eq.f32.partialorder %v439, 0.0
    %v445 = vand.u32 %v439, 2147483648
    %v446 = vsel %vm444, %v445, %v443
    %v447 = vadd.f32 %v369, %v446
    %v448 = vmul.f32 %v447, 0.5
    %v449 = vadd.f32 %v327, %v404
    %v450 = vmul.f32 %v449, 0.5
    %v451 = vadd.f32 %v353, %v430
    %v452 = vmul.f32 %v451, 0.5
    %v453 = vadd.f32 %v304, %v381
    %v454 = vmul.f32 %v453, 0.5
    %v455 = vadd.f32 %v295, %v372
    %v456 = vmul.f32 %v455, 0.5
    %v457 = vadd.f32 %v324, %v401
    %v458 = vmul.f32 %v457, 0.5
    %459 = vst [vmem:[%s4] sm:$0xff] 0.0
    %v460 = vlaneseq
    %v461 = vand.u32 %v460, 127
    %vm462 = vcmp.eq.s32.totalorder %v461, 0
    %v463 = vsel %vm462, %v448, 0.0
    %vm464 = vcmp.eq.s32.totalorder %v461, 1
    %v465 = vsel %vm464, %v450, %v463
    %vm466 = vcmp.eq.s32.totalorder %v461, 2
    %v467 = vsel %vm466, %v452, %v465
    %468 = vst [vmem:[%s4] sm:$0x3] %v467
    %469 = vst.msk [vmem:[%s4 + $0x2] sm:$0x3] %vm66, %v454
    %470 = vst.msk [vmem:[%s4 + $0x4] sm:$0x3] %vm66, %v456
    %471 = vst.msk [vmem:[%s4 + $0x6] sm:$0x3] %vm66, %v458
  $region25: #{_lambda_.1} parent=0 // pred_fallthru
    _
  // Predicated region
  $region26: #{_lambda_.1} parent=0 // pred_check
    _
  $region27: #{_lambda_.1} parent=0 // pred_check_branch
    %473 = sbr.rel (0) target = $region29
  $region28: #{_lambda_.1} parent=0 // pred_region
    _
  $region29: #{_lambda_.1} parent=0 // pred_fallthru
    _
  // Predicated region
  $region30: #{_lambda_.1} parent=0 // pred_check
    _
  $region31: #{_lambda_.1} parent=0 // pred_check_branch
    %475 = sbr.rel (0) target = $region33
  $region32: #{_lambda_.1} parent=0 // pred_region
    _
  $region33: #{_lambda_.1} parent=0 // pred_fallthru
    _

</llo_original>
